<compile_context>
chip_gen: v6e
topology: v6e:2x2x1
jax: 0.10.0
libtpu: 0.0.40
codegen_flags: <defaults>
</compile_context>

<pallas_src>
import functools

import jax
import jax.numpy as jnp
from jax.experimental import pallas as pl
from jax.experimental.pallas import tpu as pltpu


# ------------------------------ device / sizing helpers ------------------------

def _device_caps():
    """Per-generation (VMEM byte budget for the kernel, use bf16 exp in the K build)."""
    kind = ""
    try:
        kind = (getattr(jax.devices()[0], "device_kind", "") or "").lower()
    except Exception:
        pass
    if "v7" in kind:      # 64 MiB per TensorCore total -> leave DMA / internal-scratch headroom
        return 48 * 1024 * 1024, True
    if "v6" in kind:      # 128 MiB total, bf16 EUP available
        return 108 * 1024 * 1024, True
    if "v5" in kind:      # 128 MiB total, no bf16 EUP/VPU
        return 108 * 1024 * 1024, False
    return 64 * 1024 * 1024, False


def _row_block_size(P, max_tp):
    """Row block for fused K construction: largest divisor of P <= max_tp, preferring
    multiples of 8 (sublane-aligned dynamic stores). Never silently collapses to P."""
    if P <= max_tp:
        return P
    best = 1
    for tp in range(max_tp, 0, -1):
        if P % tp == 0:
            if tp % 8 == 0:
                return tp
            if best == 1:
                best = tp
    return best


def _estimate_vmem_bytes(P, L, Bt, fdim, TP):
    """Rough per-grid-step VMEM footprint of the CRF kernel (bytes)."""
    f32, bf16 = 4, 2
    rows = -(-(Bt * L) // 8) * 8                  # sublane padding of the (Bt*L, P) block
    ksp = P * P * bf16                            # shared spatial kernel (single-buffered)
    nsp = 8 * P * f32
    kbi = Bt * P * P * bf16                       # per-image bilateral kernels (scratch)
    io = 2 * (2 * rows * P * f32)                 # unaries in + Q out, double-buffered
    feats = 2 * Bt * P * f32 * (128 + 8)          # (P,d) lane-padded + (d,P) sublane-padded, x2 bufs
    ktmp = 2 * TP * P * f32                       # d2 / exp block temporaries
    work = 8 * rows * P * f32                     # q, logits, messages working set
    return ksp + nsp + kbi + io + feats + ktmp + work


# ------------------------------ in-kernel helpers -------------------------------

def _build_gauss_kernel(fpd_ref, fdp_ref, k_ref, *, tp, bf16_exp, img=None):
    """Dense Gaussian kernel K_ij = exp(-0.5*||f_i - f_j||^2), written bf16 into k_ref.

    fpd_ref: (P, d) (or (B, P, d)) f32 features; fdp_ref: (d, P) (or (B, d, P)) f32.
    k_ref:   (P, P) (or (B, P, P)) bf16.  `img` selects the leading index when present.
    Returns column sums (1, P) f32 (== row sums, K symmetric) for NORMALIZE_SYMMETRIC.
    Built row-block by row-block; lax.fori_loop bounds the f32 temporaries to one block.
    """
    f_dp = fdp_ref[...] if img is None else fdp_ref[img]            # (d, P)
    P = f_dp.shape[1]
    sq_row = jnp.sum(f_dp * f_dp, axis=0, keepdims=True)            # (1, P)

    def blk(r, colsum):
        lo = pl.multiple_of(r * tp, tp)
        f_blk = (fpd_ref[pl.ds(lo, tp), :] if img is None
                 else fpd_ref[img, pl.ds(lo, tp), :])                # (tp, d)
        g = jax.lax.dot_general(f_blk, f_dp, (((1,), (0,)), ((), ())),
                                preferred_element_type=jnp.float32)  # (tp, P)
        sq_col = jnp.sum(f_blk * f_blk, axis=1, keepdims=True)       # (tp, 1)
        d2 = jnp.maximum(sq_col + sq_row - 2.0 * g, 0.0)
        if bf16_exp:
            # v6e/v7x: bf16 EUP ~2x exp throughput; K is stored bf16 anyway.
            kb = jnp.exp((-0.5 * d2).astype(jnp.bfloat16))
        else:
            # v5e: no bf16 EUP, keep the exp in f32.
            kb = jnp.exp(-0.5 * d2)
        kbb = kb.astype(jnp.bfloat16)
        if img is None:
            k_ref[pl.ds(lo, tp), :] = kbb
        else:
            k_ref[img, pl.ds(lo, tp), :] = kbb
        return colsum + jnp.sum(kb.astype(jnp.float32), axis=0, keepdims=True)

    return jax.lax.fori_loop(0, P // tp, blk, jnp.zeros((1, P), jnp.float32))


def _softmax_classes(x):
    """Softmax over the class axis (axis 0 of an (L, P) array); approx EUP reciprocal."""
    m = jnp.max(x, axis=0, keepdims=True)
    e = jnp.exp(x - m)
    return e * pl.reciprocal(jnp.sum(e, axis=0, keepdims=True), approx=True)


# ------------------------------ Pallas kernels ----------------------------------

def _spatial_kernel(fsp_pd_ref, fsp_dp_ref, ksp_ref, nsp_ref, *, tp, bf16_exp):
    """One-time precompute of the batch-invariant spatial kernel (bf16) and its normalizer."""
    colsum = _build_gauss_kernel(fsp_pd_ref, fsp_dp_ref, ksp_ref, tp=tp, bf16_exp=bf16_exp)
    nsp_ref[...] = jax.lax.rsqrt(colsum + 1e-20)                     # (1, P)


def _crf_kernel(unary_ref, ksp_ref, nsp_ref, fbi_pd_ref, fbi_dp_ref, out_ref, kbi_ref, *,
                iterations, w_sp, w_bi, n_img, n_cls, tp, bf16_exp):
    L = n_cls
    unary = unary_ref[0]                                             # (n_img*L, P) f32
    n_sp = nsp_ref[...]                                              # (1, P) f32
    wn_sp = w_sp * n_sp                                              # Potts weight folded in

    # Per-image bilateral kernels, built fused/blocked into the bf16 VMEM scratch.
    n_bi, wn_bi = [], []
    for b in range(n_img):
        colsum_b = _build_gauss_kernel(fbi_pd_ref, fbi_dp_ref, kbi_ref,
                                       tp=tp, bf16_exp=bf16_exp, img=b)
        nb = jax.lax.rsqrt(colsum_b + 1e-20)                         # (1, P)
        n_bi.append(nb)
        wn_bi.append(w_bi * nb)

    def softmax_per_image(x):
        if n_img == 1:
            return _softmax_classes(x)
        return jnp.concatenate(
            [_softmax_classes(x[b * L:(b + 1) * L, :]) for b in range(n_img)], axis=0)

    q0 = softmax_per_image(unary)

    def body(_, q):
        # Spatial message for ALL images in one MXU pass: (n_img*L, P) @ K_sp.
        # K_sp/K_bi are read from their refs inside the body (no hoisted (P,P) copy).
        msg_sp = jax.lax.dot_general((q * n_sp).astype(jnp.bfloat16), ksp_ref[...],
                                     (((1,), (0,)), ((), ())),
                                     preferred_element_type=jnp.float32)
        base = unary + msg_sp * wn_sp
        pieces = []
        for b in range(n_img):
            qb = q[b * L:(b + 1) * L, :] if n_img > 1 else q
            msg_bi = jax.lax.dot_general((qb * n_bi[b]).astype(jnp.bfloat16), kbi_ref[b],
                                         (((1,), (0,)), ((), ())),
                                         preferred_element_type=jnp.float32)
            logits_b = (base[b * L:(b + 1) * L, :] if n_img > 1 else base) + msg_bi * wn_bi[b]
            pieces.append(_softmax_classes(logits_b))
        return pieces[0] if n_img == 1 else jnp.concatenate(pieces, axis=0)

    q = jax.lax.fori_loop(0, iterations, body, q0, unroll=True)

    # Exact final normalization (removes approx-reciprocal drift; marginals sum to 1).
    if n_img == 1:
        q = q / jnp.sum(q, axis=0, keepdims=True)
    else:
        q = jnp.concatenate(
            [q[b * L:(b + 1) * L, :] /
             jnp.sum(q[b * L:(b + 1) * L, :], axis=0, keepdims=True) for b in range(n_img)],
            axis=0)
    out_ref[0] = q.astype(out_ref.dtype)


# ------------------------------ JAX wrapper --------------------------------------

class DenseGaussianCRFPallas:
    def __init__(self, classes, height, width, alpha=80.0, beta=13.0, gamma=3.0,
                 spatial_weight=-1, bilateral_weight=-1, compat=-1, iterations=5):
        self.classes = classes
        self.height = height
        self.width = width
        self.alpha = float(alpha)
        self.beta = float(beta)
        self.gamma = float(gamma)
        self.spatial_weight = 1.0 if spatial_weight < 0 else float(spatial_weight)
        self.bilateral_weight = 1.0 if bilateral_weight < 0 else float(bilateral_weight)
        self.compat = 1.0 if compat < 0 else float(compat)
        self.iterations = int(iterations)

    def __call__(self, image, unaries):
        """image: (N, C, H, W) float; unaries: (N, L, H, W) float (logits)."""
        bsz, classes, height, width = unaries.shape
        assert classes == self.classes and height == self.height and width == self.width
        assert height == width, "reference swapaxes(0,2) quirk only well-defined for square images"
        P = height * width
        L = classes

        # ---- generation-aware sizing (review: VMEM caps, row block, batch block) ----
        cap, bf16_exp = _device_caps()
        max_tp = 512 if cap >= 96 * 1024 * 1024 else 256
        TP = _row_block_size(P, max_tp)
        fdim = 2 + image.shape[1]

        Bt = 1
        for c in range(min(bsz, 8), 0, -1):
            if bsz % c != 0:
                continue
            if _estimate_vmem_bytes(P, L, c, fdim, TP) <= int(0.95 * cap):
                Bt = c
                break
        nblk = bsz // Bt
        vmem_limit = int(cap)
        # NOTE: for very large P the bf16 (P,P) kernels would need HBM-resident streaming of the
        # K @ Q contraction; in-VMEM bf16 storage + blocked construction covers typical CRF sizes.

        # ---- glue: per-pixel features, pixels-in-lanes layout (plain JAX) ----
        ys = jnp.arange(height, dtype=jnp.float32)
        xs = jnp.arange(width, dtype=jnp.float32)
        yy, xx = jnp.meshgrid(ys, xs, indexing="ij")                  # (H, W)
        xy_dp = jnp.stack([xx.reshape(-1), yy.reshape(-1)], axis=0)   # (2, P), p = y*W + x

        fsp_dp = (xy_dp / self.gamma).astype(jnp.float32)             # (2, P)
        fsp_pd = jnp.transpose(fsp_dp, (1, 0))                        # (P, 2)

        # reference quirk: rgbim = swapaxes(image[b], 0, 2) -> colors read transposed (square imgs)
        img_t = jnp.transpose(image, (0, 3, 2, 1))                    # img_t[b,y,x,c] = image[b,c,x,y]
        rgb_dp = jnp.transpose(img_t.reshape(bsz, P, -1), (0, 2, 1)).astype(jnp.float32)  # (N, C, P)
        fbi_dp = jnp.concatenate(
            [jnp.broadcast_to((xy_dp / self.alpha)[None], (bsz, 2, P)),
             rgb_dp / self.beta], axis=1).astype(jnp.float32)         # (N, fdim, P)
        fbi_pd = jnp.transpose(fbi_dp, (0, 2, 1))                     # (N, P, fdim)

        unaries_flat = unaries.reshape(bsz, L, P).astype(jnp.float32)
        u_blocks = unaries_flat.reshape(nblk, Bt * L, P)              # Bt images stacked along M

        # ---- one-time spatial kernel precompute (batch-invariant) ----
        ksp, nsp = pl.pallas_call(
            functools.partial(_spatial_kernel, tp=TP, bf16_exp=bf16_exp),
            out_shape=(jax.ShapeDtypeStruct((P, P), jnp.bfloat16),
                       jax.ShapeDtypeStruct((1, P), jnp.float32)),
            grid_spec=pltpu.PrefetchScalarGridSpec(
                num_scalar_prefetch=0,
                grid=(1,),
                in_specs=[pl.BlockSpec((P, 2), lambda i: (0, 0)),
                          pl.BlockSpec((2, P), lambda i: (0, 0))],
                out_specs=[pl.BlockSpec((P, P), lambda i: (0, 0)),
                           pl.BlockSpec((1, P), lambda i: (0, 0))]),
            compiler_params=pltpu.CompilerParams(
                dimension_semantics=("arbitrary",),
                vmem_limit_bytes=vmem_limit),
        )(fsp_pd, fsp_dp)

        # ---- per-block (Bt images) mean-field inference ----
        kernel = functools.partial(
            _crf_kernel,
            iterations=self.iterations,
            w_sp=self.compat * self.spatial_weight,
            w_bi=self.compat * self.bilateral_weight,
            n_img=Bt, n_cls=L, tp=TP, bf16_exp=bf16_exp,
        )

        def run_crf(single_buffer_shared):
            # K_sp / n_sp have a constant block index across the grid -> single buffer (saves
            # a full (P,P) bf16 VMEM buffer); fall back to the default if unsupported.
            shared_kw = dict(pipeline_mode=pl.Buffered(1)) if single_buffer_shared else {}
            return pl.pallas_call(
                kernel,
                out_shape=jax.ShapeDtypeStruct((nblk, Bt * L, P), jnp.float32),
                grid_spec=pltpu.PrefetchScalarGridSpec(
                    num_scalar_prefetch=0,
                    grid=(nblk,),
                    in_specs=[
                        pl.BlockSpec((1, Bt * L, P), lambda g: (g, 0, 0)),      # unaries
                        pl.BlockSpec((P, P), lambda g: (0, 0), **shared_kw),    # K_sp (shared)
                        pl.BlockSpec((1, P), lambda g: (0, 0), **shared_kw),    # n_sp (shared)
                        pl.BlockSpec((Bt, P, fdim), lambda g: (g, 0, 0)),       # bilat feats (P,d)
                        pl.BlockSpec((Bt, fdim, P), lambda g: (g, 0, 0)),       # bilat feats (d,P)
                    ],
                    out_specs=pl.BlockSpec((1, Bt * L, P), lambda g: (g, 0, 0)),
                    scratch_shapes=[pltpu.VMEM((Bt, P, P), jnp.bfloat16)]),     # K_bi scratch
                compiler_params=pltpu.CompilerParams(
                    dimension_semantics=("parallel",),
                    vmem_limit_bytes=vmem_limit),
            )(u_blocks, ksp, nsp, fbi_pd, fbi_dp)

        try:
            q_blocks = run_crf(True)
        except Exception:
            # pl.Buffered(1) not accepted by this Pallas version -> default double buffering.
            q_blocks = run_crf(False)

        return q_blocks.reshape(bsz, L, height, width)


# ------------------------------ pure-JAX reference -------------------------------

def _reference_crf(image, unaries, *, alpha, beta, gamma, w_sp, w_bi, iterations):
    """Plain-JAX f32 mean-field CRF (same math, no bf16/approx), for validation."""
    bsz, L, H, W = unaries.shape
    P = H * W
    ys = jnp.arange(H, dtype=jnp.float32)
    xs = jnp.arange(W, dtype=jnp.float32)
    yy, xx = jnp.meshgrid(ys, xs, indexing="ij")
    xy = jnp.stack([xx.reshape(-1), yy.reshape(-1)], axis=-1)        # (P, 2)

    def kmat(f):
        d2 = jnp.sum((f[:, None, :] - f[None, :, :]) ** 2, axis=-1)
        return jnp.exp(-0.5 * d2)

    ksp = kmat(xy / gamma)
    nsp = 1.0 / jnp.sqrt(jnp.sum(ksp, axis=1) + 1e-20)               # (P,)

    img_t = jnp.transpose(image, (0, 3, 2, 1))
    rgb = img_t.reshape(bsz, P, -1).astype(jnp.float32)

    outs = []
    for b in range(bsz):
        fbi = jnp.concatenate([xy / alpha, rgb[b] / beta], axis=-1)
        kbi = kmat(fbi)
        nbi = 1.0 / jnp.sqrt(jnp.sum(kbi, axis=1) + 1e-20)
        u = unaries[b].reshape(L, P).astype(jnp.float32)
        q = jax.nn.softmax(u, axis=0)
        for _ in range(iterations):
            msp = ((q * nsp) @ ksp) * nsp
            mbi = ((q * nbi) @ kbi) * nbi
            q = jax.nn.softmax(u + w_sp * msp + w_bi * mbi, axis=0)
        outs.append(q.reshape(L, H, W))
    return jnp.stack(outs)


# --------------------------------- main -------------------------------------------

if __name__ == "__main__":
    key = jax.random.PRNGKey(0)
    k1, k2 = jax.random.split(key)

    bsz, C, L, H, W = 2, 3, 4, 16, 16
    image = jax.random.uniform(k1, (bsz, C, H, W), jnp.float32, 0.0, 255.0)
    unaries = jax.random.normal(k2, (bsz, L, H, W), jnp.float32) * 2.0

    crf = DenseGaussianCRFPallas(classes=L, height=H, width=W, iterations=5)
    Q = jax.block_until_ready(crf(image, unaries))

    assert Q.shape == (bsz, L, H, W)
    assert bool(jnp.all(jnp.isfinite(Q)))
    # mean-field marginals: per-pixel class distribution sums to 1
    assert bool(jnp.allclose(jnp.sum(Q, axis=1), 1.0, atol=1e-4))

    # validate the bf16-kernel / approx-reciprocal path against the exact f32 reference
    Q_ref = _reference_crf(image, unaries, alpha=80.0, beta=13.0, gamma=3.0,
                           w_sp=1.0, w_bi=1.0, iterations=5)
    max_err = float(jnp.max(jnp.abs(Q - Q_ref)))
    assert max_err < 5e-2, f"max |Q - Q_ref| = {max_err}"

    print("KERNEL_OK")
</pallas_src>

<mosaic_0001>
module attributes {stable_mosaic.version = 11 : i64} {
  func.func @_spatial_kernel(%arg0: i32, %arg1: memref<256x2xf32, #tpu.memory_space<vmem>>, %arg2: memref<2x256xf32, #tpu.memory_space<vmem>>, %arg3: memref<256x256xbf16, #tpu.memory_space<vmem>>, %arg4: memref<1x256xf32, #tpu.memory_space<vmem>>) attributes {dimension_semantics = [#tpu.dimension_semantics<arbitrary>], iteration_bounds = array<i64: 1>, scalar_prefetch = 0 : i64, scratch_operands = 0 : i64, tpu.core_type = #tpu.core_type<tc>, window_params = [{pipeline_mode = #tpu.pipeline_mode<synchronous>, transform_indices = @transform_0, window_bounds = array<i64: 256, 2>}, {pipeline_mode = #tpu.pipeline_mode<synchronous>, transform_indices = @transform_1, window_bounds = array<i64: 2, 256>}, {pipeline_mode = #tpu.pipeline_mode<synchronous>, transform_indices = @transform_2, window_bounds = array<i64: 256, 256>}, {pipeline_mode = #tpu.pipeline_mode<synchronous>, transform_indices = @transform_3, window_bounds = array<i64: 1, 256>}]} {
    %c0 = arith.constant 0 : index
    %c0_0 = arith.constant 0 : index
    %0 = vector.load %arg2[%c0, %c0_0] : memref<2x256xf32, #tpu.memory_space<vmem>>, vector<2x256xf32>
    %1 = arith.mulf %0, %0 : vector<2x256xf32>
    %cst = arith.constant dense<0.000000e+00> : vector<256xf32>
    %2 = vector.multi_reduction <add>, %1, %cst [0] : vector<2x256xf32> to vector<256xf32>
    %3 = vector.shape_cast %2 : vector<256xf32> to vector<1x256xf32>
    %cst_1 = arith.constant 0.000000e+00 : f32
    %4 = vector.broadcast %cst_1 : f32 to vector<1x256xf32>
    %c0_i32 = arith.constant 0 : i32
    %c256_i32 = arith.constant 256 : i32
    %5 = arith.muli %c0_i32, %c256_i32 : i32
    %6 = tpu.assume_multiple %5, 256 : i32
    %7 = arith.index_cast %6 : i32 to index
    %c0_2 = arith.constant 0 : index
    %8 = vector.load %arg1[%7, %c0_2] : memref<256x2xf32, #tpu.memory_space<vmem>>, vector<256x2xf32>
    %cst_3 = arith.constant dense<0.000000e+00> : vector<256x256xf32>
    %9 = tpu.matmul %8, %0, %cst_3 {dimension_numbers = #tpu.dot_dimension_numbers<[1], [0], [0], [1], [0, 0, 1, 1], [], []>} : vector<256x2xf32>, vector<2x256xf32>, vector<256x256xf32> -> vector<256x256xf32>
    %10 = arith.mulf %8, %8 : vector<256x2xf32>
    %cst_4 = arith.constant dense<0.000000e+00> : vector<256xf32>
    %11 = vector.multi_reduction <add>, %10, %cst_4 [1] : vector<256x2xf32> to vector<256xf32>
    %12 = vector.shape_cast %11 : vector<256xf32> to vector<256x1xf32>
    %13 = vector.broadcast %12 : vector<256x1xf32> to vector<256x256xf32>
    %14 = vector.broadcast %3 : vector<1x256xf32> to vector<256x256xf32>
    %15 = arith.addf %13, %14 : vector<256x256xf32>
    %cst_5 = arith.constant 2.000000e+00 : f32
    %16 = vector.broadcast %cst_5 : f32 to vector<256x256xf32>
    %17 = arith.mulf %16, %9 : vector<256x256xf32>
    %18 = arith.subf %15, %17 : vector<256x256xf32>
    %cst_6 = arith.constant 0.000000e+00 : f32
    %19 = vector.broadcast %cst_6 : f32 to vector<256x256xf32>
    %20 = arith.maximumf %18, %19 : vector<256x256xf32>
    %cst_7 = arith.constant -5.000000e-01 : f32
    %21 = vector.broadcast %cst_7 : f32 to vector<256x256xf32>
    %22 = arith.mulf %21, %20 : vector<256x256xf32>
    %23 = math.exp %22 : vector<256x256xf32>
    %24 = arith.truncf %23 : vector<256x256xf32> to vector<256x256xbf16>
    %25 = arith.index_cast %6 : i32 to index
    %c0_8 = arith.constant 0 : index
    %26 = vector.load %arg3[%25, %c0_8] : memref<256x256xbf16, #tpu.memory_space<vmem>>, vector<256x256xbf16>
    tpu.vector_store %arg3[%25, %c0_8], %24 {strides = array<i32>} : memref<256x256xbf16, #tpu.memory_space<vmem>>, vector<256x256xbf16>,
    %cst_9 = arith.constant dense<0.000000e+00> : vector<256xf32>
    %27 = vector.multi_reduction <add>, %23, %cst_9 [0] : vector<256x256xf32> to vector<256xf32>
    %28 = vector.shape_cast %27 : vector<256xf32> to vector<1x256xf32>
    %29 = arith.addf %4, %28 : vector<1x256xf32>
    %c1_i32 = arith.constant 1 : i32
    %cst_10 = arith.constant 9.99999968E-21 : f32
    %30 = vector.broadcast %cst_10 : f32 to vector<1x256xf32>
    %31 = arith.addf %29, %30 : vector<1x256xf32>
    %32 = math.rsqrt %31 : vector<1x256xf32>
    %c0_11 = arith.constant 0 : index
    %c0_12 = arith.constant 0 : index
    %33 = vector.load %arg4[%c0_11, %c0_12] : memref<1x256xf32, #tpu.memory_space<vmem>>, vector<1x256xf32>
    tpu.vector_store %arg4[%c0_11, %c0_12], %32 {strides = array<i32>} : memref<1x256xf32, #tpu.memory_space<vmem>>, vector<1x256xf32>,
    return
  }
  func.func @transform_0(%arg0: i32) -> (i32, i32) {
    %c0_i32 = arith.constant 0 : i32
    %c0_i32_0 = arith.constant 0 : i32
    %c0_i32_1 = arith.constant 0 : i32
    return %c0_i32, %c0_i32_0 : i32, i32
  }
  func.func @transform_1(%arg0: i32) -> (i32, i32) {
    %c0_i32 = arith.constant 0 : i32
    %c0_i32_0 = arith.constant 0 : i32
    %c0_i32_1 = arith.constant 0 : i32
    return %c0_i32, %c0_i32_0 : i32, i32
  }
  func.func @transform_2(%arg0: i32) -> (i32, i32) {
    %c0_i32 = arith.constant 0 : i32
    %c0_i32_0 = arith.constant 0 : i32
    %c0_i32_1 = arith.constant 0 : i32
    return %c0_i32, %c0_i32_0 : i32, i32
  }
  func.func @transform_3(%arg0: i32) -> (i32, i32) {
    %c0_i32 = arith.constant 0 : i32
    %c0_i32_0 = arith.constant 0 : i32
    %c0_i32_1 = arith.constant 0 : i32
    return %c0_i32, %c0_i32_0 : i32, i32
  }
}

</mosaic_0001>

<llo_original>
// kernel: tpu_custom_call.1
$region0: #{tpu_custom_call.1}
  #allocation0 [shape = 'u32[]', space=smem, size = 0x4, offset = 0x4, fixed_abs, tag = 'smem constant byte address 0x4 - core index']
  #allocation1 [shape = 'u32[144,128]{1,0:T(1,128)}', space=vmem, size = 0x12000, scoped, tag = 'internal scratch']
  %s0 = inlined_call_operand.vmem [shape: f32[256,2], index: 0, kind: input, shape index: {}]
  %s1 = inlined_call_operand.vmem [shape: f32[2,256], index: 1, kind: input, shape index: {}]
  %s2 = inlined_call_operand.hbm [shape: bf16[256,256], index: 2, kind: output, shape index: {0}]
  %s3 = inlined_call_operand.hbm [shape: f32[1,256], index: 3, kind: output, shape index: {1}]
  %4 = xla_tuple %s2, %s3
  %s5 = sld [smem:[#allocation0]]
  $region26: #{tpu_custom_call.1} parent=0
    _
  %s7 = ssub.s32 1, %s5
  %s8 = scalar_select 0, %s7, %s5
  $region1: #{tpu_custom_call.1} parent=0
    #allocation2 [shape = 'u8[131072]{0}', space=vmem, size = 0x20000, scoped, tag = 'output window, operand 0, single buffered']
    #allocation3 [shape = 's32[1]{0}', space=sflag, size = 0x4, scoped, tag = 'scoped memory for tpu_custom_call.1']
    #allocation4 [shape = 'u8[1024]{0}', space=vmem, size = 0x400, scoped, tag = 'output window, operand 1, single buffered']
    #allocation5 [shape = 's32[1]{0}', space=sflag, size = 0x4, scoped, tag = 'scoped memory for tpu_custom_call.1']
    %9 = vsyncpa [#allocation3], 0
    %10 = vsyncpa [#allocation5], 0
    // Predicated region
    $region2: #{tpu_custom_call.1} parent=1 // pred_check
      _
    $region3: #{tpu_custom_call.1} parent=1 // pred_check_branch
      %12 = sbr.rel (0) target = $region5
    $region4: #{tpu_custom_call.1} parent=1 // pred_region
      _
    $region5: #{tpu_custom_call.1} parent=1 // pred_fallthru
      _
    // Predicated region
    $region6: #{tpu_custom_call.1} parent=1 // pred_check
      _
    $region7: #{tpu_custom_call.1} parent=1 // pred_check_branch
      %14 = sbr.rel (0) target = $region9
    $region8: #{tpu_custom_call.1} parent=1 // pred_region
      _
    $region9: #{tpu_custom_call.1} parent=1 // pred_fallthru
      _
    %v15 = vld [vmem:[%s1] sm:$0xf]
    %v16 = vmul.f32 %v15, %v15
    %v19 = vunpack.c.l.s4 1983009808
    %v20 = vunpack.c.0.s8 %v19
    %v21 = vlaneseq
    %v22 = vshrl.u32 %v21, 7
    %v23 = vsub.s32 %v20, %v22
    %v24 = vrot.slane %v16, %v23
    %v25 = vcombine.high %v24, %v24
    %vm28 = vcmask 1041408
    %v29 = vsel %vm28, %v24, 0.0
    %v30 = vrot.slane %v29, 4
    %v31 = vadd.f32 %v29, %v30
    %v32 = vrot.slane %v31, 2
    %v33 = vadd.f32 %v31, %v32
    %v34 = vrot.slane %v33, 1
    %v35 = vadd.f32 %v33, %v34
    %v36 = vsel %vm28, %v25, 0.0
    %v37 = vrot.slane %v36, 4
    %v38 = vadd.f32 %v36, %v37
    %v39 = vrot.slane %v38, 2
    %v40 = vadd.f32 %v38, %v39
    %v41 = vrot.slane %v40, 1
    %v42 = vadd.f32 %v40, %v41
    %v43 = vld [vmem:[%s0] sm:$0xff]
    %v44 = vld [vmem:[%s0 + $0x8] sm:$0xff]
    %v45 = vld [vmem:[%s0 + $0x10] sm:$0xff]
    %v46 = vld [vmem:[%s0 + $0x18] sm:$0xff]
    %v47 = vld [vmem:[%s0 + $0x20] sm:$0xff]
    %v48 = vld [vmem:[%s0 + $0x28] sm:$0xff]
    %v49 = vld [vmem:[%s0 + $0x30] sm:$0xff]
    %v50 = vld [vmem:[%s0 + $0x38] sm:$0xff]
    %v51 = vld [vmem:[%s0 + $0x40] sm:$0xff]
    %v52 = vld [vmem:[%s0 + $0x48] sm:$0xff]
    %v53 = vld [vmem:[%s0 + $0x50] sm:$0xff]
    %v54 = vld [vmem:[%s0 + $0x58] sm:$0xff]
    %v55 = vld [vmem:[%s0 + $0x60] sm:$0xff]
    %v56 = vld [vmem:[%s0 + $0x68] sm:$0xff]
    %v57 = vld [vmem:[%s0 + $0x70] sm:$0xff]
    %v58 = vld [vmem:[%s0 + $0x78] sm:$0xff]
    %v59 = vld [vmem:[%s0 + $0x80] sm:$0xff]
    %v60 = vld [vmem:[%s0 + $0x88] sm:$0xff]
    %v61 = vld [vmem:[%s0 + $0x90] sm:$0xff]
    %v62 = vld [vmem:[%s0 + $0x98] sm:$0xff]
    %v63 = vld [vmem:[%s0 + $0xa0] sm:$0xff]
    %v64 = vld [vmem:[%s0 + $0xa8] sm:$0xff]
    %v65 = vld [vmem:[%s0 + $0xb0] sm:$0xff]
    %v66 = vld [vmem:[%s0 + $0xb8] sm:$0xff]
    %v67 = vld [vmem:[%s0 + $0xc0] sm:$0xff]
    %v68 = vld [vmem:[%s0 + $0xc8] sm:$0xff]
    %v69 = vld [vmem:[%s0 + $0xd0] sm:$0xff]
    %v70 = vld [vmem:[%s0 + $0xd8] sm:$0xff]
    %v71 = vld [vmem:[%s0 + $0xe0] sm:$0xff]
    %v72 = vld [vmem:[%s0 + $0xe8] sm:$0xff]
    %v73 = vld [vmem:[%s0 + $0xf0] sm:$0xff]
    %v74 = vld [vmem:[%s0 + $0xf8] sm:$0xff]
    %v77 = vunpack.c.l.s4 1983009808
    %v78 = vunpack.c.0.s8 %v77
    %v79 = vlaneseq
    %v80 = vshrl.u32 %v79, 7
    %v81 = vsub.s32 %v78, %v80
    %v82 = vrot.slane %v15, %v81
    %v83 = vcombine.high %v82, %v82
    %vm84 = vcmask 15360
    %v86 = vsel %vm84, %v43, 0
    %v89 = vsel %vm84, %v44, 0
    %v92 = vsel %vm84, %v45, 0
    %v95 = vsel %vm84, %v46, 0
    %v98 = vsel %vm84, %v47, 0
    %v101 = vsel %vm84, %v48, 0
    %v104 = vsel %vm84, %v49, 0
    %v107 = vsel %vm84, %v50, 0
    %v110 = vsel %vm84, %v51, 0
    %v113 = vsel %vm84, %v52, 0
    %v116 = vsel %vm84, %v53, 0
    %v119 = vsel %vm84, %v54, 0
    %v122 = vsel %vm84, %v55, 0
    %v125 = vsel %vm84, %v56, 0
    %v128 = vsel %vm84, %v57, 0
    %v131 = vsel %vm84, %v58, 0
    %v134 = vsel %vm84, %v59, 0
    %v137 = vsel %vm84, %v60, 0
    %v140 = vsel %vm84, %v61, 0
    %v143 = vsel %vm84, %v62, 0
    %v146 = vsel %vm84, %v63, 0
    %v149 = vsel %vm84, %v64, 0
    %v152 = vsel %vm84, %v65, 0
    %v155 = vsel %vm84, %v66, 0
    %v158 = vsel %vm84, %v67, 0
    %v161 = vsel %vm84, %v68, 0
    %v164 = vsel %vm84, %v69, 0
    %v167 = vsel %vm84, %v70, 0
    %v170 = vsel %vm84, %v71, 0
    %v173 = vsel %vm84, %v72, 0
    %v176 = vsel %vm84, %v73, 0
    %v179 = vsel %vm84, %v74, 0
    %v181 = vsel %vm28, %v82, 0
    %v183 = vsel %vm28, %v83, 0
    %185 = vmatprep.subr.mxu0 0.0
    %186 = vmatpush1.msra.mxu0 0.0
    %187 = vmatprep.subr.mxu0 0.0
    %188 = vmatpush1.msra.mxu0 0.0
    %189 = vmatprep.subr.mxu0 0.0
    %190 = vmatpush1.msra.mxu0 0.0
    %191 = vmatprep.subr.mxu0 0.0
    %192 = vmatpush1.msra.mxu0 0.0
    %193 = vmatprep.subr.mxu0 0.0
    %194 = vmatpush1.msra.mxu0 0.0
    %195 = vmatprep.subr.mxu0 0.0
    %196 = vmatpush1.msra.mxu0 0.0
    %197 = vmatprep.subr.mxu0 0.0
    %198 = vmatpush1.msra.mxu0 0.0
    %199 = vmatprep.subr.mxu0 0.0
    %200 = vmatpush1.msra.mxu0 0.0
    %201 = vmatprep.subr.mxu0 0.0
    %202 = vmatpush1.msra.mxu0 0.0
    %203 = vmatprep.subr.mxu0 0.0
    %204 = vmatpush1.msra.mxu0 0.0
    %205 = vmatprep.subr.mxu0 0.0
    %206 = vmatpush1.msra.mxu0 0.0
    %207 = vmatprep.subr.mxu0 0.0
    %208 = vmatpush1.msra.mxu0 0.0
    %209 = vmatprep.subr.mxu0 0.0
    %210 = vmatpush1.msra.mxu0 0.0
    %211 = vmatprep.subr.mxu0 0.0
    %212 = vmatpush1.msra.mxu0 0.0
    %213 = vmatprep.subr.mxu0 0.0
    %214 = vmatpush1.msra.mxu0 0.0
    %215 = vmatprep.subr.mxu0 %v183
    %216 = vmatpush1.msra.mxu0 %v181
    %217 = vmatprep.subr.mxu0 0.0
    %218 = vmatpush2.msra.mxu0 0.0
    %219 = vmatprep.subr.mxu0 0.0
    %220 = vmatpush2.msra.mxu0 0.0
    %221 = vmatprep.subr.mxu0 0.0
    %222 = vmatpush2.msra.mxu0 0.0
    %223 = vmatprep.subr.mxu0 0.0
    %224 = vmatpush2.msra.mxu0 0.0
    %225 = vmatprep.subr.mxu0 0.0
    %226 = vmatpush2.msra.mxu0 0.0
    %227 = vmatprep.subr.mxu0 0.0
    %228 = vmatpush2.msra.mxu0 0.0
    %229 = vmatprep.subr.mxu0 0.0
    %230 = vmatpush2.msra.mxu0 0.0
    %231 = vmatprep.subr.mxu0 0.0
    %232 = vmatpush2.msra.mxu0 0.0
    %233 = vmatprep.subr.mxu0 0.0
    %234 = vmatpush2.msra.mxu0 0.0
    %235 = vmatprep.subr.mxu0 0.0
    %236 = vmatpush2.msra.mxu0 0.0
    %237 = vmatprep.subr.mxu0 0.0
    %238 = vmatpush2.msra.mxu0 0.0
    %239 = vmatprep.subr.mxu0 0.0
    %240 = vmatpush2.msra.mxu0 0.0
    %241 = vmatprep.subr.mxu0 0.0
    %242 = vmatpush2.msra.mxu0 0.0
    %243 = vmatprep.subr.mxu0 0.0
    %244 = vmatpush2.msra.mxu0 0.0
    %245 = vmatprep.subr.mxu0 0.0
    %246 = vmatpush2.msra.mxu0 0.0
    %247 = vmatprep.subr.mxu0 0.0
    %248 = vmatpush2.msra.mxu0 0.0
    %249 = vmatprep.mubr.f32.mxu0 0.0
    %250 = vmatmul.mubr.f32.gmra.mxu0 %v86
    %v251 = vpop.f32.mrf.mxu0
    %v252 = vadd.f32 0.0, %v251
    %v253 = vpop.f32.mrf.mxu0
    %v254 = vadd.f32 0.0, %v253
    %255 = vmatprep.mubr.f32.mxu0 0.0
    %256 = vmatmul.mubr.f32.gmra.mxu0 %v89
    %v257 = vpop.f32.mrf.mxu0
    %v258 = vadd.f32 0.0, %v257
    %v259 = vpop.f32.mrf.mxu0
    %v260 = vadd.f32 0.0, %v259
    %261 = vmatprep.mubr.f32.mxu0 0.0
    %262 = vmatmul.mubr.f32.gmra.mxu0 %v92
    %v263 = vpop.f32.mrf.mxu0
    %v264 = vadd.f32 0.0, %v263
    %v265 = vpop.f32.mrf.mxu0
    %v266 = vadd.f32 0.0, %v265
    %267 = vmatprep.mubr.f32.mxu0 0.0
    %268 = vmatmul.mubr.f32.gmra.mxu0 %v95
    %v269 = vpop.f32.mrf.mxu0
    %v270 = vadd.f32 0.0, %v269
    %v271 = vpop.f32.mrf.mxu0
    %v272 = vadd.f32 0.0, %v271
    %273 = vmatprep.mubr.f32.mxu0 0.0
    %274 = vmatmul.mubr.f32.gmra.mxu0 %v98
    %v275 = vpop.f32.mrf.mxu0
    %v276 = vadd.f32 0.0, %v275
    %v277 = vpop.f32.mrf.mxu0
    %v278 = vadd.f32 0.0, %v277
    %279 = vmatprep.mubr.f32.mxu0 0.0
    %280 = vmatmul.mubr.f32.gmra.mxu0 %v101
    %v281 = vpop.f32.mrf.mxu0
    %v282 = vadd.f32 0.0, %v281
    %v283 = vpop.f32.mrf.mxu0
    %v284 = vadd.f32 0.0, %v283
    %285 = vmatprep.mubr.f32.mxu0 0.0
    %286 = vmatmul.mubr.f32.gmra.mxu0 %v104
    %v287 = vpop.f32.mrf.mxu0
    %v288 = vadd.f32 0.0, %v287
    %v289 = vpop.f32.mrf.mxu0
    %v290 = vadd.f32 0.0, %v289
    %291 = vmatprep.mubr.f32.mxu0 0.0
    %292 = vmatmul.mubr.f32.gmra.mxu0 %v107
    %v293 = vpop.f32.mrf.mxu0
    %v294 = vadd.f32 0.0, %v293
    %v295 = vpop.f32.mrf.mxu0
    %v296 = vadd.f32 0.0, %v295
    %297 = vmatprep.mubr.f32.mxu0 0.0
    %298 = vmatmul.mubr.f32.gmra.mxu0 %v110
    %v299 = vpop.f32.mrf.mxu0
    %v300 = vadd.f32 0.0, %v299
    %v301 = vpop.f32.mrf.mxu0
    %v302 = vadd.f32 0.0, %v301
    %303 = vmatprep.mubr.f32.mxu0 0.0
    %304 = vmatmul.mubr.f32.gmra.mxu0 %v113
    %v305 = vpop.f32.mrf.mxu0
    %v306 = vadd.f32 0.0, %v305
    %v307 = vpop.f32.mrf.mxu0
    %v308 = vadd.f32 0.0, %v307
    %309 = vmatprep.mubr.f32.mxu0 0.0
    %310 = vmatmul.mubr.f32.gmra.mxu0 %v116
    %v311 = vpop.f32.mrf.mxu0
    %v312 = vadd.f32 0.0, %v311
    %v313 = vpop.f32.mrf.mxu0
    %v314 = vadd.f32 0.0, %v313
    %315 = vmatprep.mubr.f32.mxu0 0.0
    %316 = vmatmul.mubr.f32.gmra.mxu0 %v119
    %v317 = vpop.f32.mrf.mxu0
    %v318 = vadd.f32 0.0, %v317
    %v319 = vpop.f32.mrf.mxu0
    %v320 = vadd.f32 0.0, %v319
    %321 = vmatprep.mubr.f32.mxu0 0.0
    %322 = vmatmul.mubr.f32.gmra.mxu0 %v122
    %v323 = vpop.f32.mrf.mxu0
    %v324 = vadd.f32 0.0, %v323
    %v325 = vpop.f32.mrf.mxu0
    %v326 = vadd.f32 0.0, %v325
    %327 = vmatprep.mubr.f32.mxu0 0.0
    %328 = vmatmul.mubr.f32.gmra.mxu0 %v125
    %v329 = vpop.f32.mrf.mxu0
    %v330 = vadd.f32 0.0, %v329
    %v331 = vpop.f32.mrf.mxu0
    %v332 = vadd.f32 0.0, %v331
    %333 = vmatprep.mubr.f32.mxu0 0.0
    %334 = vmatmul.mubr.f32.gmra.mxu0 %v128
    %v335 = vpop.f32.mrf.mxu0
    %v336 = vadd.f32 0.0, %v335
    %v337 = vpop.f32.mrf.mxu0
    %v338 = vadd.f32 0.0, %v337
    %339 = vmatprep.mubr.f32.mxu0 0.0
    %340 = vmatmul.mubr.f32.gmra.mxu0 %v131
    %v341 = vpop.f32.mrf.mxu0
    %v342 = vadd.f32 0.0, %v341
    %v343 = vpop.f32.mrf.mxu0
    %v344 = vadd.f32 0.0, %v343
    %345 = vmatprep.mubr.f32.mxu0 0.0
    %346 = vmatmul.mubr.f32.gmra.mxu0 %v134
    %v347 = vpop.f32.mrf.mxu0
    %v348 = vadd.f32 0.0, %v347
    %v349 = vpop.f32.mrf.mxu0
    %v350 = vadd.f32 0.0, %v349
    %351 = vmatprep.mubr.f32.mxu0 0.0
    %352 = vmatmul.mubr.f32.gmra.mxu0 %v137
    %v353 = vpop.f32.mrf.mxu0
    %v354 = vadd.f32 0.0, %v353
    %v355 = vpop.f32.mrf.mxu0
    %v356 = vadd.f32 0.0, %v355
    %357 = vmatprep.mubr.f32.mxu0 0.0
    %358 = vmatmul.mubr.f32.gmra.mxu0 %v140
    %v359 = vpop.f32.mrf.mxu0
    %v360 = vadd.f32 0.0, %v359
    %v361 = vpop.f32.mrf.mxu0
    %v362 = vadd.f32 0.0, %v361
    %363 = vmatprep.mubr.f32.mxu0 0.0
    %364 = vmatmul.mubr.f32.gmra.mxu0 %v143
    %v365 = vpop.f32.mrf.mxu0
    %v366 = vadd.f32 0.0, %v365
    %v367 = vpop.f32.mrf.mxu0
    %v368 = vadd.f32 0.0, %v367
    %369 = vmatprep.mubr.f32.mxu0 0.0
    %370 = vmatmul.mubr.f32.gmra.mxu0 %v146
    %v371 = vpop.f32.mrf.mxu0
    %v372 = vadd.f32 0.0, %v371
    %v373 = vpop.f32.mrf.mxu0
    %v374 = vadd.f32 0.0, %v373
    %375 = vmatprep.mubr.f32.mxu0 0.0
    %376 = vmatmul.mubr.f32.gmra.mxu0 %v149
    %v377 = vpop.f32.mrf.mxu0
    %v378 = vadd.f32 0.0, %v377
    %v379 = vpop.f32.mrf.mxu0
    %v380 = vadd.f32 0.0, %v379
    %381 = vmatprep.mubr.f32.mxu0 0.0
    %382 = vmatmul.mubr.f32.gmra.mxu0 %v152
    %v383 = vpop.f32.mrf.mxu0
    %v384 = vadd.f32 0.0, %v383
    %v385 = vpop.f32.mrf.mxu0
    %v386 = vadd.f32 0.0, %v385
    %387 = vmatprep.mubr.f32.mxu0 0.0
    %388 = vmatmul.mubr.f32.gmra.mxu0 %v155
    %v389 = vpop.f32.mrf.mxu0
    %v390 = vadd.f32 0.0, %v389
    %v391 = vpop.f32.mrf.mxu0
    %v392 = vadd.f32 0.0, %v391
    %393 = vmatprep.mubr.f32.mxu0 0.0
    %394 = vmatmul.mubr.f32.gmra.mxu0 %v158
    %v395 = vpop.f32.mrf.mxu0
    %v396 = vadd.f32 0.0, %v395
    %v397 = vpop.f32.mrf.mxu0
    %v398 = vadd.f32 0.0, %v397
    %399 = vmatprep.mubr.f32.mxu0 0.0
    %400 = vmatmul.mubr.f32.gmra.mxu0 %v161
    %v401 = vpop.f32.mrf.mxu0
    %v402 = vadd.f32 0.0, %v401
    %v403 = vpop.f32.mrf.mxu0
    %v404 = vadd.f32 0.0, %v403
    %405 = vmatprep.mubr.f32.mxu0 0.0
    %406 = vmatmul.mubr.f32.gmra.mxu0 %v164
    %v407 = vpop.f32.mrf.mxu0
    %v408 = vadd.f32 0.0, %v407
    %v409 = vpop.f32.mrf.mxu0
    %v410 = vadd.f32 0.0, %v409
    %411 = vmatprep.mubr.f32.mxu0 0.0
    %412 = vmatmul.mubr.f32.gmra.mxu0 %v167
    %v413 = vpop.f32.mrf.mxu0
    %v414 = vadd.f32 0.0, %v413
    %v415 = vpop.f32.mrf.mxu0
    %v416 = vadd.f32 0.0, %v415
    %417 = vmatprep.mubr.f32.mxu0 0.0
    %418 = vmatmul.mubr.f32.gmra.mxu0 %v170
    %v419 = vpop.f32.mrf.mxu0
    %v420 = vadd.f32 0.0, %v419
    %v421 = vpop.f32.mrf.mxu0
    %v422 = vadd.f32 0.0, %v421
    %423 = vmatprep.mubr.f32.mxu0 0.0
    %424 = vmatmul.mubr.f32.gmra.mxu0 %v173
    %v425 = vpop.f32.mrf.mxu0
    %v426 = vadd.f32 0.0, %v425
    %v427 = vpop.f32.mrf.mxu0
    %v428 = vadd.f32 0.0, %v427
    %429 = vmatprep.mubr.f32.mxu0 0.0
    %430 = vmatmul.mubr.f32.gmra.mxu0 %v176
    %v431 = vpop.f32.mrf.mxu0
    %v432 = vadd.f32 0.0, %v431
    %v433 = vpop.f32.mrf.mxu0
    %v434 = vadd.f32 0.0, %v433
    %435 = vmatprep.mubr.f32.mxu0 0.0
    %436 = vmatmul.mubr.f32.gmra.mxu0 %v179
    %v437 = vpop.f32.mrf.mxu0
    %v438 = vadd.f32 0.0, %v437
    %v439 = vpop.f32.mrf.mxu0
    %v440 = vadd.f32 0.0, %v439
    %441 = vdwg.mxu0
    %v442 = vmul.f32 %v43, %v43
    %v443 = vmul.f32 %v44, %v44
    %v444 = vmul.f32 %v45, %v45
    %v445 = vmul.f32 %v46, %v46
    %v446 = vmul.f32 %v47, %v47
    %v447 = vmul.f32 %v48, %v48
    %v448 = vmul.f32 %v49, %v49
    %v449 = vmul.f32 %v50, %v50
    %v450 = vmul.f32 %v51, %v51
    %v451 = vmul.f32 %v52, %v52
    %v452 = vmul.f32 %v53, %v53
    %v453 = vmul.f32 %v54, %v54
    %v454 = vmul.f32 %v55, %v55
    %v455 = vmul.f32 %v56, %v56
    %v456 = vmul.f32 %v57, %v57
    %v457 = vmul.f32 %v58, %v58
    %v458 = vmul.f32 %v59, %v59
    %v459 = vmul.f32 %v60, %v60
    %v460 = vmul.f32 %v61, %v61
    %v461 = vmul.f32 %v62, %v62
    %v462 = vmul.f32 %v63, %v63
    %v463 = vmul.f32 %v64, %v64
    %v464 = vmul.f32 %v65, %v65
    %v465 = vmul.f32 %v66, %v66
    %v466 = vmul.f32 %v67, %v67
    %v467 = vmul.f32 %v68, %v68
    %v468 = vmul.f32 %v69, %v69
    %v469 = vmul.f32 %v70, %v70
    %v470 = vmul.f32 %v71, %v71
    %v471 = vmul.f32 %v72, %v72
    %v472 = vmul.f32 %v73, %v73
    %v473 = vmul.f32 %v74, %v74
    %v474 = vsel %vm84, %v442, 0.0
    %475 = vadd.xlane.f32.xlu0 %v474
    %v476 = vpop.xlane.xlu0 %475
    %v477 = vsel %vm84, %v443, 0.0
    %478 = vadd.xlane.f32.xlu0 %v477
    %v479 = vpop.xlane.xlu0 %478
    %v480 = vsel %vm84, %v444, 0.0
    %481 = vadd.xlane.f32.xlu0 %v480
    %v482 = vpop.xlane.xlu0 %481
    %v483 = vsel %vm84, %v445, 0.0
    %484 = vadd.xlane.f32.xlu0 %v483
    %v485 = vpop.xlane.xlu0 %484
    %v486 = vsel %vm84, %v446, 0.0
    %487 = vadd.xlane.f32.xlu0 %v486
    %v488 = vpop.xlane.xlu0 %487
    %v489 = vsel %vm84, %v447, 0.0
    %490 = vadd.xlane.f32.xlu0 %v489
    %v491 = vpop.xlane.xlu0 %490
    %v492 = vsel %vm84, %v448, 0.0
    %493 = vadd.xlane.f32.xlu0 %v492
    %v494 = vpop.xlane.xlu0 %493
    %v495 = vsel %vm84, %v449, 0.0
    %496 = vadd.xlane.f32.xlu0 %v495
    %v497 = vpop.xlane.xlu0 %496
    %v498 = vsel %vm84, %v450, 0.0
    %499 = vadd.xlane.f32.xlu0 %v498
    %v500 = vpop.xlane.xlu0 %499
    %v501 = vsel %vm84, %v451, 0.0
    %502 = vadd.xlane.f32.xlu0 %v501
    %v503 = vpop.xlane.xlu0 %502
    %v504 = vsel %vm84, %v452, 0.0
    %505 = vadd.xlane.f32.xlu0 %v504
    %v506 = vpop.xlane.xlu0 %505
    %v507 = vsel %vm84, %v453, 0.0
    %508 = vadd.xlane.f32.xlu0 %v507
    %v509 = vpop.xlane.xlu0 %508
    %v510 = vsel %vm84, %v454, 0.0
    %511 = vadd.xlane.f32.xlu0 %v510
    %v512 = vpop.xlane.xlu0 %511
    %v513 = vsel %vm84, %v455, 0.0
    %514 = vadd.xlane.f32.xlu0 %v513
    %v515 = vpop.xlane.xlu0 %514
    %v516 = vsel %vm84, %v456, 0.0
    %517 = vadd.xlane.f32.xlu0 %v516
    %v518 = vpop.xlane.xlu0 %517
    %v519 = vsel %vm84, %v457, 0.0
    %520 = vadd.xlane.f32.xlu0 %v519
    %v521 = vpop.xlane.xlu0 %520
    %v522 = vsel %vm84, %v458, 0.0
    %523 = vadd.xlane.f32.xlu0 %v522
    %v524 = vpop.xlane.xlu0 %523
    %v525 = vsel %vm84, %v459, 0.0
    %526 = vadd.xlane.f32.xlu0 %v525
    %v527 = vpop.xlane.xlu0 %526
    %v528 = vsel %vm84, %v460, 0.0
    %529 = vadd.xlane.f32.xlu0 %v528
    %v530 = vpop.xlane.xlu0 %529
    %v531 = vsel %vm84, %v461, 0.0
    %532 = vadd.xlane.f32.xlu0 %v531
    %v533 = vpop.xlane.xlu0 %532
    %v534 = vsel %vm84, %v462, 0.0
    %535 = vadd.xlane.f32.xlu0 %v534
    %v536 = vpop.xlane.xlu0 %535
    %v537 = vsel %vm84, %v463, 0.0
    %538 = vadd.xlane.f32.xlu0 %v537
    %v539 = vpop.xlane.xlu0 %538
    %v540 = vsel %vm84, %v464, 0.0
    %541 = vadd.xlane.f32.xlu0 %v540
    %v542 = vpop.xlane.xlu0 %541
    %v543 = vsel %vm84, %v465, 0.0
    %544 = vadd.xlane.f32.xlu0 %v543
    %v545 = vpop.xlane.xlu0 %544
    %v546 = vsel %vm84, %v466, 0.0
    %547 = vadd.xlane.f32.xlu0 %v546
    %v548 = vpop.xlane.xlu0 %547
    %v549 = vsel %vm84, %v467, 0.0
    %550 = vadd.xlane.f32.xlu0 %v549
    %v551 = vpop.xlane.xlu0 %550
    %v552 = vsel %vm84, %v468, 0.0
    %553 = vadd.xlane.f32.xlu0 %v552
    %v554 = vpop.xlane.xlu0 %553
    %v555 = vsel %vm84, %v469, 0.0
    %556 = vadd.xlane.f32.xlu0 %v555
    %v557 = vpop.xlane.xlu0 %556
    %v558 = vsel %vm84, %v470, 0.0
    %559 = vadd.xlane.f32.xlu0 %v558
    %v560 = vpop.xlane.xlu0 %559
    %v561 = vsel %vm84, %v471, 0.0
    %562 = vadd.xlane.f32.xlu0 %v561
    %v563 = vpop.xlane.xlu0 %562
    %v564 = vsel %vm84, %v472, 0.0
    %565 = vadd.xlane.f32.xlu0 %v564
    %v566 = vpop.xlane.xlu0 %565
    %v567 = vsel %vm84, %v473, 0.0
    %568 = vadd.xlane.f32.xlu0 %v567
    %v569 = vpop.xlane.xlu0 %568
    %v570 = vadd.f32 %v476, %v35
    %v571 = vadd.f32 %v476, %v42
    %v572 = vadd.f32 %v479, %v35
    %v573 = vadd.f32 %v479, %v42
    %v574 = vadd.f32 %v482, %v35
    %v575 = vadd.f32 %v482, %v42
    %v576 = vadd.f32 %v485, %v35
    %v577 = vadd.f32 %v485, %v42
    %v578 = vadd.f32 %v488, %v35
    %v579 = vadd.f32 %v488, %v42
    %v580 = vadd.f32 %v491, %v35
    %v581 = vadd.f32 %v491, %v42
    %v582 = vadd.f32 %v494, %v35
    %v583 = vadd.f32 %v494, %v42
    %v584 = vadd.f32 %v497, %v35
    %v585 = vadd.f32 %v497, %v42
    %v586 = vadd.f32 %v500, %v35
    %v587 = vadd.f32 %v500, %v42
    %v588 = vadd.f32 %v503, %v35
    %v589 = vadd.f32 %v503, %v42
    %v590 = vadd.f32 %v506, %v35
    %v591 = vadd.f32 %v506, %v42
    %v592 = vadd.f32 %v509, %v35
    %v593 = vadd.f32 %v509, %v42
    %v594 = vadd.f32 %v512, %v35
    %v595 = vadd.f32 %v512, %v42
    %v596 = vadd.f32 %v515, %v35
    %v597 = vadd.f32 %v515, %v42
    %v598 = vadd.f32 %v518, %v35
    %v599 = vadd.f32 %v518, %v42
    %v600 = vadd.f32 %v521, %v35
    %v601 = vadd.f32 %v521, %v42
    %v602 = vadd.f32 %v524, %v35
    %v603 = vadd.f32 %v524, %v42
    %v604 = vadd.f32 %v527, %v35
    %v605 = vadd.f32 %v527, %v42
    %v606 = vadd.f32 %v530, %v35
    %v607 = vadd.f32 %v530, %v42
    %v608 = vadd.f32 %v533, %v35
    %v609 = vadd.f32 %v533, %v42
    %v610 = vadd.f32 %v536, %v35
    %v611 = vadd.f32 %v536, %v42
    %v612 = vadd.f32 %v539, %v35
    %v613 = vadd.f32 %v539, %v42
    %v614 = vadd.f32 %v542, %v35
    %v615 = vadd.f32 %v542, %v42
    %v616 = vadd.f32 %v545, %v35
    %v617 = vadd.f32 %v545, %v42
    %v618 = vadd.f32 %v548, %v35
    %v619 = vadd.f32 %v548, %v42
    %v620 = vadd.f32 %v551, %v35
    %v621 = vadd.f32 %v551, %v42
    %v622 = vadd.f32 %v554, %v35
    %v623 = vadd.f32 %v554, %v42
    %v624 = vadd.f32 %v557, %v35
    %v625 = vadd.f32 %v557, %v42
    %v626 = vadd.f32 %v560, %v35
    %v627 = vadd.f32 %v560, %v42
    %v628 = vadd.f32 %v563, %v35
    %v629 = vadd.f32 %v563, %v42
    %v630 = vadd.f32 %v566, %v35
    %v631 = vadd.f32 %v566, %v42
    %v632 = vadd.f32 %v569, %v35
    %v633 = vadd.f32 %v569, %v42
    %v634 = vmul.f32 %v252, 2.0
    %v635 = vmul.f32 %v254, 2.0
    %v636 = vmul.f32 %v258, 2.0
    %v637 = vmul.f32 %v260, 2.0
    %v638 = vmul.f32 %v264, 2.0
    %v639 = vmul.f32 %v266, 2.0
    %v640 = vmul.f32 %v270, 2.0
    %v641 = vmul.f32 %v272, 2.0
    %v642 = vmul.f32 %v276, 2.0
    %v643 = vmul.f32 %v278, 2.0
    %v644 = vmul.f32 %v282, 2.0
    %v645 = vmul.f32 %v284, 2.0
    %v646 = vmul.f32 %v288, 2.0
    %v647 = vmul.f32 %v290, 2.0
    %v648 = vmul.f32 %v294, 2.0
    %v649 = vmul.f32 %v296, 2.0
    %v650 = vmul.f32 %v300, 2.0
    %v651 = vmul.f32 %v302, 2.0
    %v652 = vmul.f32 %v306, 2.0
    %v653 = vmul.f32 %v308, 2.0
    %v654 = vmul.f32 %v312, 2.0
    %v655 = vmul.f32 %v314, 2.0
    %v656 = vmul.f32 %v318, 2.0
    %v657 = vmul.f32 %v320, 2.0
    %v658 = vmul.f32 %v324, 2.0
    %v659 = vmul.f32 %v326, 2.0
    %v660 = vmul.f32 %v330, 2.0
    %v661 = vmul.f32 %v332, 2.0
    %v662 = vmul.f32 %v336, 2.0
    %v663 = vmul.f32 %v338, 2.0
    %v664 = vmul.f32 %v342, 2.0
    %v665 = vmul.f32 %v344, 2.0
    %v666 = vmul.f32 %v348, 2.0
    %v667 = vmul.f32 %v350, 2.0
    %v668 = vmul.f32 %v354, 2.0
    %v669 = vmul.f32 %v356, 2.0
    %v670 = vmul.f32 %v360, 2.0
    %v671 = vmul.f32 %v362, 2.0
    %v672 = vmul.f32 %v366, 2.0
    %v673 = vmul.f32 %v368, 2.0
    %v674 = vmul.f32 %v372, 2.0
    %v675 = vmul.f32 %v374, 2.0
    %v676 = vmul.f32 %v378, 2.0
    %v677 = vmul.f32 %v380, 2.0
    %v678 = vmul.f32 %v384, 2.0
    %v679 = vmul.f32 %v386, 2.0
    %v680 = vmul.f32 %v390, 2.0
    %v681 = vmul.f32 %v392, 2.0
    %v682 = vmul.f32 %v396, 2.0
    %v683 = vmul.f32 %v398, 2.0
    %v684 = vmul.f32 %v402, 2.0
    %v685 = vmul.f32 %v404, 2.0
    %v686 = vmul.f32 %v408, 2.0
    %v687 = vmul.f32 %v410, 2.0
    %v688 = vmul.f32 %v414, 2.0
    %v689 = vmul.f32 %v416, 2.0
    %v690 = vmul.f32 %v420, 2.0
    %v691 = vmul.f32 %v422, 2.0
    %v692 = vmul.f32 %v426, 2.0
    %v693 = vmul.f32 %v428, 2.0
    %v694 = vmul.f32 %v432, 2.0
    %v695 = vmul.f32 %v434, 2.0
    %v696 = vmul.f32 %v438, 2.0
    %v697 = vmul.f32 %v440, 2.0
    %v698 = vsub.f32 %v570, %v634
    %v699 = vsub.f32 %v571, %v635
    %v700 = vsub.f32 %v572, %v636
    %v701 = vsub.f32 %v573, %v637
    %v702 = vsub.f32 %v574, %v638
    %v703 = vsub.f32 %v575, %v639
    %v704 = vsub.f32 %v576, %v640
    %v705 = vsub.f32 %v577, %v641
    %v706 = vsub.f32 %v578, %v642
    %v707 = vsub.f32 %v579, %v643
    %v708 = vsub.f32 %v580, %v644
    %v709 = vsub.f32 %v581, %v645
    %v710 = vsub.f32 %v582, %v646
    %v711 = vsub.f32 %v583, %v647
    %v712 = vsub.f32 %v584, %v648
    %v713 = vsub.f32 %v585, %v649
    %v714 = vsub.f32 %v586, %v650
    %v715 = vsub.f32 %v587, %v651
    %v716 = vsub.f32 %v588, %v652
    %v717 = vsub.f32 %v589, %v653
    %v718 = vsub.f32 %v590, %v654
    %v719 = vsub.f32 %v591, %v655
    %v720 = vsub.f32 %v592, %v656
    %v721 = vsub.f32 %v593, %v657
    %v722 = vsub.f32 %v594, %v658
    %v723 = vsub.f32 %v595, %v659
    %v724 = vsub.f32 %v596, %v660
    %v725 = vsub.f32 %v597, %v661
    %v726 = vsub.f32 %v598, %v662
    %v727 = vsub.f32 %v599, %v663
    %v728 = vsub.f32 %v600, %v664
    %v729 = vsub.f32 %v601, %v665
    %v730 = vsub.f32 %v602, %v666
    %v731 = vsub.f32 %v603, %v667
    %v732 = vsub.f32 %v604, %v668
    %v733 = vsub.f32 %v605, %v669
    %v734 = vsub.f32 %v606, %v670
    %v735 = vsub.f32 %v607, %v671
    %v736 = vsub.f32 %v608, %v672
    %v737 = vsub.f32 %v609, %v673
    %v738 = vsub.f32 %v610, %v674
    %v739 = vsub.f32 %v611, %v675
    %v740 = vsub.f32 %v612, %v676
    %v741 = vsub.f32 %v613, %v677
    %v742 = vsub.f32 %v614, %v678
    %v743 = vsub.f32 %v615, %v679
    %v744 = vsub.f32 %v616, %v680
    %v745 = vsub.f32 %v617, %v681
    %v746 = vsub.f32 %v618, %v682
    %v747 = vsub.f32 %v619, %v683
    %v748 = vsub.f32 %v620, %v684
    %v749 = vsub.f32 %v621, %v685
    %v750 = vsub.f32 %v622, %v686
    %v751 = vsub.f32 %v623, %v687
    %v752 = vsub.f32 %v624, %v688
    %v753 = vsub.f32 %v625, %v689
    %v754 = vsub.f32 %v626, %v690
    %v755 = vsub.f32 %v627, %v691
    %v756 = vsub.f32 %v628, %v692
    %v757 = vsub.f32 %v629, %v693
    %v758 = vsub.f32 %v630, %v694
    %v759 = vsub.f32 %v631, %v695
    %v760 = vsub.f32 %v632, %v696
    %v761 = vsub.f32 %v633, %v697
    %v762 = vmax.f32 %v698, 0.0
    %v763 = vmax.f32 %v699, 0.0
    %v764 = vmax.f32 %v700, 0.0
    %v765 = vmax.f32 %v701, 0.0
    %v766 = vmax.f32 %v702, 0.0
    %v767 = vmax.f32 %v703, 0.0
    %v768 = vmax.f32 %v704, 0.0
    %v769 = vmax.f32 %v705, 0.0
    %v770 = vmax.f32 %v706, 0.0
    %v771 = vmax.f32 %v707, 0.0
    %v772 = vmax.f32 %v708, 0.0
    %v773 = vmax.f32 %v709, 0.0
    %v774 = vmax.f32 %v710, 0.0
    %v775 = vmax.f32 %v711, 0.0
    %v776 = vmax.f32 %v712, 0.0
    %v777 = vmax.f32 %v713, 0.0
    %v778 = vmax.f32 %v714, 0.0
    %v779 = vmax.f32 %v715, 0.0
    %v780 = vmax.f32 %v716, 0.0
    %v781 = vmax.f32 %v717, 0.0
    %v782 = vmax.f32 %v718, 0.0
    %v783 = vmax.f32 %v719, 0.0
    %v784 = vmax.f32 %v720, 0.0
    %v785 = vmax.f32 %v721, 0.0
    %v786 = vmax.f32 %v722, 0.0
    %v787 = vmax.f32 %v723, 0.0
    %v788 = vmax.f32 %v724, 0.0
    %v789 = vmax.f32 %v725, 0.0
    %v790 = vmax.f32 %v726, 0.0
    %v791 = vmax.f32 %v727, 0.0
    %v792 = vmax.f32 %v728, 0.0
    %v793 = vmax.f32 %v729, 0.0
    %v794 = vmax.f32 %v730, 0.0
    %v795 = vmax.f32 %v731, 0.0
    %v796 = vmax.f32 %v732, 0.0
    %v797 = vmax.f32 %v733, 0.0
    %v798 = vmax.f32 %v734, 0.0
    %v799 = vmax.f32 %v735, 0.0
    %v800 = vmax.f32 %v736, 0.0
    %v801 = vmax.f32 %v737, 0.0
    %v802 = vmax.f32 %v738, 0.0
    %v803 = vmax.f32 %v739, 0.0
    %v804 = vmax.f32 %v740, 0.0
    %v805 = vmax.f32 %v741, 0.0
    %v806 = vmax.f32 %v742, 0.0
    %v807 = vmax.f32 %v743, 0.0
    %v808 = vmax.f32 %v744, 0.0
    %v809 = vmax.f32 %v745, 0.0
    %v810 = vmax.f32 %v746, 0.0
    %v811 = vmax.f32 %v747, 0.0
    %v812 = vmax.f32 %v748, 0.0
    %v813 = vmax.f32 %v749, 0.0
    %v814 = vmax.f32 %v750, 0.0
    %v815 = vmax.f32 %v751, 0.0
    %v816 = vmax.f32 %v752, 0.0
    %v817 = vmax.f32 %v753, 0.0
    %v818 = vmax.f32 %v754, 0.0
    %v819 = vmax.f32 %v755, 0.0
    %v820 = vmax.f32 %v756, 0.0
    %v821 = vmax.f32 %v757, 0.0
    %v822 = vmax.f32 %v758, 0.0
    %v823 = vmax.f32 %v759, 0.0
    %v824 = vmax.f32 %v760, 0.0
    %v825 = vmax.f32 %v761, 0.0
    %v826 = vmul.f32 %v762, -0.5
    %v827 = vmul.f32 %v763, -0.5
    %v828 = vmul.f32 %v764, -0.5
    %v829 = vmul.f32 %v765, -0.5
    %v830 = vmul.f32 %v766, -0.5
    %v831 = vmul.f32 %v767, -0.5
    %v832 = vmul.f32 %v768, -0.5
    %v833 = vmul.f32 %v769, -0.5
    %v834 = vmul.f32 %v770, -0.5
    %v835 = vmul.f32 %v771, -0.5
    %v836 = vmul.f32 %v772, -0.5
    %v837 = vmul.f32 %v773, -0.5
    %v838 = vmul.f32 %v774, -0.5
    %v839 = vmul.f32 %v775, -0.5
    %v840 = vmul.f32 %v776, -0.5
    %v841 = vmul.f32 %v777, -0.5
    %v842 = vmul.f32 %v778, -0.5
    %v843 = vmul.f32 %v779, -0.5
    %v844 = vmul.f32 %v780, -0.5
    %v845 = vmul.f32 %v781, -0.5
    %v846 = vmul.f32 %v782, -0.5
    %v847 = vmul.f32 %v783, -0.5
    %v848 = vmul.f32 %v784, -0.5
    %v849 = vmul.f32 %v785, -0.5
    %v850 = vmul.f32 %v786, -0.5
    %v851 = vmul.f32 %v787, -0.5
    %v852 = vmul.f32 %v788, -0.5
    %v853 = vmul.f32 %v789, -0.5
    %v854 = vmul.f32 %v790, -0.5
    %v855 = vmul.f32 %v791, -0.5
    %v856 = vmul.f32 %v792, -0.5
    %v857 = vmul.f32 %v793, -0.5
    %v858 = vmul.f32 %v794, -0.5
    %v859 = vmul.f32 %v795, -0.5
    %v860 = vmul.f32 %v796, -0.5
    %v861 = vmul.f32 %v797, -0.5
    %v862 = vmul.f32 %v798, -0.5
    %v863 = vmul.f32 %v799, -0.5
    %v864 = vmul.f32 %v800, -0.5
    %v865 = vmul.f32 %v801, -0.5
    %v866 = vmul.f32 %v802, -0.5
    %v867 = vmul.f32 %v803, -0.5
    %v868 = vmul.f32 %v804, -0.5
    %v869 = vmul.f32 %v805, -0.5
    %v870 = vmul.f32 %v806, -0.5
    %v871 = vmul.f32 %v807, -0.5
    %v872 = vmul.f32 %v808, -0.5
    %v873 = vmul.f32 %v809, -0.5
    %v874 = vmul.f32 %v810, -0.5
    %v875 = vmul.f32 %v811, -0.5
    %v876 = vmul.f32 %v812, -0.5
    %v877 = vmul.f32 %v813, -0.5
    %v878 = vmul.f32 %v814, -0.5
    %v879 = vmul.f32 %v815, -0.5
    %v880 = vmul.f32 %v816, -0.5
    %v881 = vmul.f32 %v817, -0.5
    %v882 = vmul.f32 %v818, -0.5
    %v883 = vmul.f32 %v819, -0.5
    %v884 = vmul.f32 %v820, -0.5
    %v885 = vmul.f32 %v821, -0.5
    %v886 = vmul.f32 %v822, -0.5
    %v887 = vmul.f32 %v823, -0.5
    %v888 = vmul.f32 %v824, -0.5
    %v889 = vmul.f32 %v825, -0.5
    %v890 = vmul.f32 %v826, 1.442695
    %v891 = vpow.pop %v890
    %v892 = vmul.f32 %v827, 1.442695
    %v893 = vpow.pop %v892
    %v894 = vmul.f32 %v828, 1.442695
    %v895 = vpow.pop %v894
    %v896 = vmul.f32 %v829, 1.442695
    %v897 = vpow.pop %v896
    %v898 = vmul.f32 %v830, 1.442695
    %v899 = vpow.pop %v898
    %v900 = vmul.f32 %v831, 1.442695
    %v901 = vpow.pop %v900
    %v902 = vmul.f32 %v832, 1.442695
    %v903 = vpow.pop %v902
    %v904 = vmul.f32 %v833, 1.442695
    %v905 = vpow.pop %v904
    %v906 = vmul.f32 %v834, 1.442695
    %v907 = vpow.pop %v906
    %v908 = vmul.f32 %v835, 1.442695
    %v909 = vpow.pop %v908
    %v910 = vmul.f32 %v836, 1.442695
    %v911 = vpow.pop %v910
    %v912 = vmul.f32 %v837, 1.442695
    %v913 = vpow.pop %v912
    %v914 = vmul.f32 %v838, 1.442695
    %v915 = vpow.pop %v914
    %v916 = vmul.f32 %v839, 1.442695
    %v917 = vpow.pop %v916
    %v918 = vmul.f32 %v840, 1.442695
    %v919 = vpow.pop %v918
    %v920 = vmul.f32 %v841, 1.442695
    %v921 = vpow.pop %v920
    %v922 = vmul.f32 %v842, 1.442695
    %v923 = vpow.pop %v922
    %v924 = vmul.f32 %v843, 1.442695
    %v925 = vpow.pop %v924
    %v926 = vmul.f32 %v844, 1.442695
    %v927 = vpow.pop %v926
    %v928 = vmul.f32 %v845, 1.442695
    %v929 = vpow.pop %v928
    %v930 = vmul.f32 %v846, 1.442695
    %v931 = vpow.pop %v930
    %v932 = vmul.f32 %v847, 1.442695
    %v933 = vpow.pop %v932
    %v934 = vmul.f32 %v848, 1.442695
    %v935 = vpow.pop %v934
    %v936 = vmul.f32 %v849, 1.442695
    %v937 = vpow.pop %v936
    %v938 = vmul.f32 %v850, 1.442695
    %v939 = vpow.pop %v938
    %v940 = vmul.f32 %v851, 1.442695
    %v941 = vpow.pop %v940
    %v942 = vmul.f32 %v852, 1.442695
    %v943 = vpow.pop %v942
    %v944 = vmul.f32 %v853, 1.442695
    %v945 = vpow.pop %v944
    %v946 = vmul.f32 %v854, 1.442695
    %v947 = vpow.pop %v946
    %v948 = vmul.f32 %v855, 1.442695
    %v949 = vpow.pop %v948
    %v950 = vmul.f32 %v856, 1.442695
    %v951 = vpow.pop %v950
    %v952 = vmul.f32 %v857, 1.442695
    %v953 = vpow.pop %v952
    %v954 = vmul.f32 %v858, 1.442695
    %v955 = vpow.pop %v954
    %v956 = vmul.f32 %v859, 1.442695
    %v957 = vpow.pop %v956
    %v958 = vmul.f32 %v860, 1.442695
    %v959 = vpow.pop %v958
    %v960 = vmul.f32 %v861, 1.442695
    %v961 = vpow.pop %v960
    %v962 = vmul.f32 %v862, 1.442695
    %v963 = vpow.pop %v962
    %v964 = vmul.f32 %v863, 1.442695
    %v965 = vpow.pop %v964
    %v966 = vmul.f32 %v864, 1.442695
    %v967 = vpow.pop %v966
    %v968 = vmul.f32 %v865, 1.442695
    %v969 = vpow.pop %v968
    %v970 = vmul.f32 %v866, 1.442695
    %v971 = vpow.pop %v970
    %v972 = vmul.f32 %v867, 1.442695
    %v973 = vpow.pop %v972
    %v974 = vmul.f32 %v868, 1.442695
    %v975 = vpow.pop %v974
    %v976 = vmul.f32 %v869, 1.442695
    %v977 = vpow.pop %v976
    %v978 = vmul.f32 %v870, 1.442695
    %v979 = vpow.pop %v978
    %v980 = vmul.f32 %v871, 1.442695
    %v981 = vpow.pop %v980
    %v982 = vmul.f32 %v872, 1.442695
    %v983 = vpow.pop %v982
    %v984 = vmul.f32 %v873, 1.442695
    %v985 = vpow.pop %v984
    %v986 = vmul.f32 %v874, 1.442695
    %v987 = vpow.pop %v986
    %v988 = vmul.f32 %v875, 1.442695
    %v989 = vpow.pop %v988
    %v990 = vmul.f32 %v876, 1.442695
    %v991 = vpow.pop %v990
    %v992 = vmul.f32 %v877, 1.442695
    %v993 = vpow.pop %v992
    %v994 = vmul.f32 %v878, 1.442695
    %v995 = vpow.pop %v994
    %v996 = vmul.f32 %v879, 1.442695
    %v997 = vpow.pop %v996
    %v998 = vmul.f32 %v880, 1.442695
    %v999 = vpow.pop %v998
    %v1000 = vmul.f32 %v881, 1.442695
    %v1001 = vpow.pop %v1000
    %v1002 = vmul.f32 %v882, 1.442695
    %v1003 = vpow.pop %v1002
    %v1004 = vmul.f32 %v883, 1.442695
    %v1005 = vpow.pop %v1004
    %v1006 = vmul.f32 %v884, 1.442695
    %v1007 = vpow.pop %v1006
    %v1008 = vmul.f32 %v885, 1.442695
    %v1009 = vpow.pop %v1008
    %v1010 = vmul.f32 %v886, 1.442695
    %v1011 = vpow.pop %v1010
    %v1012 = vmul.f32 %v887, 1.442695
    %v1013 = vpow.pop %v1012
    %v1014 = vmul.f32 %v888, 1.442695
    %v1015 = vpow.pop %v1014
    %v1016 = vmul.f32 %v889, 1.442695
    %v1017 = vpow.pop %v1016
    %v1018 = vpack.c.bf16 %v895, %v891
    %v1019 = vpack.c.bf16 %v897, %v893
    %v1020 = vpack.c.bf16 %v903, %v899
    %v1021 = vpack.c.bf16 %v905, %v901
    %v1022 = vpack.c.bf16 %v911, %v907
    %v1023 = vpack.c.bf16 %v913, %v909
    %v1024 = vpack.c.bf16 %v919, %v915
    %v1025 = vpack.c.bf16 %v921, %v917
    %v1026 = vpack.c.bf16 %v927, %v923
    %v1027 = vpack.c.bf16 %v929, %v925
    %v1028 = vpack.c.bf16 %v935, %v931
    %v1029 = vpack.c.bf16 %v937, %v933
    %v1030 = vpack.c.bf16 %v943, %v939
    %v1031 = vpack.c.bf16 %v945, %v941
    %v1032 = vpack.c.bf16 %v951, %v947
    %v1033 = vpack.c.bf16 %v953, %v949
    %v1034 = vpack.c.bf16 %v959, %v955
    %v1035 = vpack.c.bf16 %v961, %v957
    %v1036 = vpack.c.bf16 %v967, %v963
    %v1037 = vpack.c.bf16 %v969, %v965
    %v1038 = vpack.c.bf16 %v975, %v971
    %v1039 = vpack.c.bf16 %v977, %v973
    %v1040 = vpack.c.bf16 %v983, %v979
    %v1041 = vpack.c.bf16 %v985, %v981
    %v1042 = vpack.c.bf16 %v991, %v987
    %v1043 = vpack.c.bf16 %v993, %v989
    %v1044 = vpack.c.bf16 %v999, %v995
    %v1045 = vpack.c.bf16 %v1001, %v997
    %v1046 = vpack.c.bf16 %v1007, %v1003
    %v1047 = vpack.c.bf16 %v1009, %v1005
    %v1048 = vpack.c.bf16 %v1015, %v1011
    %v1049 = vpack.c.bf16 %v1017, %v1013
    %v1082 = vunpack.c.l.b16 %v1018
    %v1083 = vunpack.c.l.b16 %v1019
    %v1084 = vunpack.c.h.b16 %v1018
    %v1085 = vunpack.c.h.b16 %v1019
    %v1086 = vunpack.c.l.b16 %v1020
    %v1087 = vunpack.c.l.b16 %v1021
    %v1088 = vunpack.c.h.b16 %v1020
    %v1089 = vunpack.c.h.b16 %v1021
    %v1090 = vunpack.c.l.b16 %v1022
    %v1091 = vunpack.c.l.b16 %v1023
    %v1092 = vunpack.c.h.b16 %v1022
    %v1093 = vunpack.c.h.b16 %v1023
    %v1094 = vunpack.c.l.b16 %v1024
    %v1095 = vunpack.c.l.b16 %v1025
    %v1096 = vunpack.c.h.b16 %v1024
    %v1097 = vunpack.c.h.b16 %v1025
    %v1098 = vunpack.c.l.b16 %v1026
    %v1099 = vunpack.c.l.b16 %v1027
    %v1100 = vunpack.c.h.b16 %v1026
    %v1101 = vunpack.c.h.b16 %v1027
    %v1102 = vunpack.c.l.b16 %v1028
    %v1103 = vunpack.c.l.b16 %v1029
    %v1104 = vunpack.c.h.b16 %v1028
    %v1105 = vunpack.c.h.b16 %v1029
    %v1106 = vunpack.c.l.b16 %v1030
    %v1107 = vunpack.c.l.b16 %v1031
    %v1108 = vunpack.c.h.b16 %v1030
    %v1109 = vunpack.c.h.b16 %v1031
    %v1110 = vunpack.c.l.b16 %v1032
    %v1111 = vunpack.c.l.b16 %v1033
    %v1112 = vunpack.c.h.b16 %v1032
    %v1113 = vunpack.c.h.b16 %v1033
    %v1114 = vunpack.c.l.b16 %v1034
    %v1115 = vunpack.c.l.b16 %v1035
    %v1116 = vunpack.c.h.b16 %v1034
    %v1117 = vunpack.c.h.b16 %v1035
    %v1118 = vunpack.c.l.b16 %v1036
    %v1119 = vunpack.c.l.b16 %v1037
    %v1120 = vunpack.c.h.b16 %v1036
    %v1121 = vunpack.c.h.b16 %v1037
    %v1122 = vunpack.c.l.b16 %v1038
    %v1123 = vunpack.c.l.b16 %v1039
    %v1124 = vunpack.c.h.b16 %v1038
    %v1125 = vunpack.c.h.b16 %v1039
    %v1126 = vunpack.c.l.b16 %v1040
    %v1127 = vunpack.c.l.b16 %v1041
    %v1128 = vunpack.c.h.b16 %v1040
    %v1129 = vunpack.c.h.b16 %v1041
    %v1130 = vunpack.c.l.b16 %v1042
    %v1131 = vunpack.c.l.b16 %v1043
    %v1132 = vunpack.c.h.b16 %v1042
    %v1133 = vunpack.c.h.b16 %v1043
    %v1134 = vunpack.c.l.b16 %v1044
    %v1135 = vunpack.c.l.b16 %v1045
    %v1136 = vunpack.c.h.b16 %v1044
    %v1137 = vunpack.c.h.b16 %v1045
    %v1138 = vunpack.c.l.b16 %v1046
    %v1139 = vunpack.c.l.b16 %v1047
    %v1140 = vunpack.c.h.b16 %v1046
    %v1141 = vunpack.c.h.b16 %v1047
    %v1142 = vunpack.c.l.b16 %v1048
    %v1143 = vunpack.c.l.b16 %v1049
    %v1144 = vunpack.c.h.b16 %v1048
    %v1145 = vunpack.c.h.b16 %v1049
    %v1146 = vpack.c.b16 %v1083, %v1082
    %v1147 = vpack.c.b16 %v1085, %v1084
    %v1148 = vpack.c.b16 %v1087, %v1086
    %v1149 = vpack.c.b16 %v1089, %v1088
    %v1150 = vpack.c.b16 %v1091, %v1090
    %v1151 = vpack.c.b16 %v1093, %v1092
    %v1152 = vpack.c.b16 %v1095, %v1094
    %v1153 = vpack.c.b16 %v1097, %v1096
    %v1154 = vpack.c.b16 %v1099, %v1098
    %v1155 = vpack.c.b16 %v1101, %v1100
    %v1156 = vpack.c.b16 %v1103, %v1102
    %v1157 = vpack.c.b16 %v1105, %v1104
    %v1158 = vpack.c.b16 %v1107, %v1106
    %v1159 = vpack.c.b16 %v1109, %v1108
    %v1160 = vpack.c.b16 %v1111, %v1110
    %v1161 = vpack.c.b16 %v1113, %v1112
    %v1162 = vpack.c.b16 %v1115, %v1114
    %v1163 = vpack.c.b16 %v1117, %v1116
    %v1164 = vpack.c.b16 %v1119, %v1118
    %v1165 = vpack.c.b16 %v1121, %v1120
    %v1166 = vpack.c.b16 %v1123, %v1122
    %v1167 = vpack.c.b16 %v1125, %v1124
    %v1168 = vpack.c.b16 %v1127, %v1126
    %v1169 = vpack.c.b16 %v1129, %v1128
    %v1170 = vpack.c.b16 %v1131, %v1130
    %v1171 = vpack.c.b16 %v1133, %v1132
    %v1172 = vpack.c.b16 %v1135, %v1134
    %v1173 = vpack.c.b16 %v1137, %v1136
    %v1174 = vpack.c.b16 %v1139, %v1138
    %v1175 = vpack.c.b16 %v1141, %v1140
    %v1176 = vpack.c.b16 %v1143, %v1142
    %v1177 = vpack.c.b16 %v1145, %v1144
    %s1210 = smul.u32 0, 2
    %s1211 = smul.addr %s1210, 4
    %s1212 = scalar_lea.vmem [#allocation2], %s1211
    %1213 = vst [vmem:[%s1212] sm:$0xff] %v1146
    %1214 = vst [vmem:[%s1212 + $0x8] sm:$0xff] %v1147
    %1215 = vst [vmem:[%s1212 + $0x10] sm:$0xff] %v1148
    %1216 = vst [vmem:[%s1212 + $0x18] sm:$0xff] %v1149
    %1217 = vst [vmem:[%s1212 + $0x20] sm:$0xff] %v1150
    %1218 = vst [vmem:[%s1212 + $0x28] sm:$0xff] %v1151
    %1219 = vst [vmem:[%s1212 + $0x30] sm:$0xff] %v1152
    %1220 = vst [vmem:[%s1212 + $0x38] sm:$0xff] %v1153
    %1221 = vst [vmem:[%s1212 + $0x40] sm:$0xff] %v1154
    %1222 = vst [vmem:[%s1212 + $0x48] sm:$0xff] %v1155
    %1223 = vst [vmem:[%s1212 + $0x50] sm:$0xff] %v1156
    %1224 = vst [vmem:[%s1212 + $0x58] sm:$0xff] %v1157
    %1225 = vst [vmem:[%s1212 + $0x60] sm:$0xff] %v1158
    %1226 = vst [vmem:[%s1212 + $0x68] sm:$0xff] %v1159
    %1227 = vst [vmem:[%s1212 + $0x70] sm:$0xff] %v1160
    %1228 = vst [vmem:[%s1212 + $0x78] sm:$0xff] %v1161
    %1229 = vst [vmem:[%s1212 + $0x80] sm:$0xff] %v1162
    %1230 = vst [vmem:[%s1212 + $0x88] sm:$0xff] %v1163
    %1231 = vst [vmem:[%s1212 + $0x90] sm:$0xff] %v1164
    %1232 = vst [vmem:[%s1212 + $0x98] sm:$0xff] %v1165
    %1233 = vst [vmem:[%s1212 + $0xa0] sm:$0xff] %v1166
    %1234 = vst [vmem:[%s1212 + $0xa8] sm:$0xff] %v1167
    %1235 = vst [vmem:[%s1212 + $0xb0] sm:$0xff] %v1168
    %1236 = vst [vmem:[%s1212 + $0xb8] sm:$0xff] %v1169
    %1237 = vst [vmem:[%s1212 + $0xc0] sm:$0xff] %v1170
    %1238 = vst [vmem:[%s1212 + $0xc8] sm:$0xff] %v1171
    %1239 = vst [vmem:[%s1212 + $0xd0] sm:$0xff] %v1172
    %1240 = vst [vmem:[%s1212 + $0xd8] sm:$0xff] %v1173
    %1241 = vst [vmem:[%s1212 + $0xe0] sm:$0xff] %v1174
    %1242 = vst [vmem:[%s1212 + $0xe8] sm:$0xff] %v1175
    %1243 = vst [vmem:[%s1212 + $0xf0] sm:$0xff] %v1176
    %1244 = vst [vmem:[%s1212 + $0xf8] sm:$0xff] %v1177
    %v1245 = vadd.f32 %v891, %v895
    %v1246 = vadd.f32 %v1245, %v899
    %v1247 = vadd.f32 %v1246, %v903
    %v1248 = vadd.f32 %v1247, %v907
    %v1249 = vadd.f32 %v1248, %v911
    %v1250 = vadd.f32 %v1249, %v915
    %v1251 = vadd.f32 %v1250, %v919
    %v1252 = vadd.f32 %v1251, %v923
    %v1253 = vadd.f32 %v1252, %v927
    %v1254 = vadd.f32 %v1253, %v931
    %v1255 = vadd.f32 %v1254, %v935
    %v1256 = vadd.f32 %v1255, %v939
    %v1257 = vadd.f32 %v1256, %v943
    %v1258 = vadd.f32 %v1257, %v947
    %v1259 = vadd.f32 %v1258, %v951
    %v1260 = vadd.f32 %v1259, %v955
    %v1261 = vadd.f32 %v1260, %v959
    %v1262 = vadd.f32 %v1261, %v963
    %v1263 = vadd.f32 %v1262, %v967
    %v1264 = vadd.f32 %v1263, %v971
    %v1265 = vadd.f32 %v1264, %v975
    %v1266 = vadd.f32 %v1265, %v979
    %v1267 = vadd.f32 %v1266, %v983
    %v1268 = vadd.f32 %v1267, %v987
    %v1269 = vadd.f32 %v1268, %v991
    %v1270 = vadd.f32 %v1269, %v995
    %v1271 = vadd.f32 %v1270, %v999
    %v1272 = vadd.f32 %v1271, %v1003
    %v1273 = vadd.f32 %v1272, %v1007
    %v1274 = vadd.f32 %v1273, %v1011
    %v1275 = vadd.f32 %v1274, %v1015
    %v1276 = vrot.slane %v1275, 4
    %v1277 = vadd.f32 %v1275, %v1276
    %v1278 = vrot.slane %v1277, 2
    %v1279 = vadd.f32 %v1277, %v1278
    %v1280 = vrot.slane %v1279, 1
    %v1281 = vadd.f32 %v1279, %v1280
    %v1282 = vadd.f32 %v893, %v897
    %v1283 = vadd.f32 %v1282, %v901
    %v1284 = vadd.f32 %v1283, %v905
    %v1285 = vadd.f32 %v1284, %v909
    %v1286 = vadd.f32 %v1285, %v913
    %v1287 = vadd.f32 %v1286, %v917
    %v1288 = vadd.f32 %v1287, %v921
    %v1289 = vadd.f32 %v1288, %v925
    %v1290 = vadd.f32 %v1289, %v929
    %v1291 = vadd.f32 %v1290, %v933
    %v1292 = vadd.f32 %v1291, %v937
    %v1293 = vadd.f32 %v1292, %v941
    %v1294 = vadd.f32 %v1293, %v945
    %v1295 = vadd.f32 %v1294, %v949
    %v1296 = vadd.f32 %v1295, %v953
    %v1297 = vadd.f32 %v1296, %v957
    %v1298 = vadd.f32 %v1297, %v961
    %v1299 = vadd.f32 %v1298, %v965
    %v1300 = vadd.f32 %v1299, %v969
    %v1301 = vadd.f32 %v1300, %v973
    %v1302 = vadd.f32 %v1301, %v977
    %v1303 = vadd.f32 %v1302, %v981
    %v1304 = vadd.f32 %v1303, %v985
    %v1305 = vadd.f32 %v1304, %v989
    %v1306 = vadd.f32 %v1305, %v993
    %v1307 = vadd.f32 %v1306, %v997
    %v1308 = vadd.f32 %v1307, %v1001
    %v1309 = vadd.f32 %v1308, %v1005
    %v1310 = vadd.f32 %v1309, %v1009
    %v1311 = vadd.f32 %v1310, %v1013
    %v1312 = vadd.f32 %v1311, %v1017
    %v1313 = vrot.slane %v1312, 4
    %v1314 = vadd.f32 %v1312, %v1313
    %v1315 = vrot.slane %v1314, 2
    %v1316 = vadd.f32 %v1314, %v1315
    %v1317 = vrot.slane %v1316, 1
    %v1318 = vadd.f32 %v1316, %v1317
    %v1319 = vadd.f32 %v1281, 0.0
    %v1320 = vadd.f32 %v1318, 0.0
    %v1321 = vadd.f32 %v1319, 1e-20
    %v1322 = vadd.f32 %v1320, 1e-20
    %v1323 = vrsqrt.pop %v1321
    %v1324 = vrsqrt.pop %v1322
    %v1327 = vcombine.low %v1323, %v1324
    %v1329 = vunpack.c.l.s4 1966171168
    %v1330 = vunpack.c.0.s8 %v1329
    %v1331 = vlaneseq
    %v1332 = vshrl.u32 %v1331, 7
    %v1333 = vsub.s32 %v1330, %v1332
    %v1334 = vrot.slane %v1327, %v1333
    %v1336 = vunpack.c.l.s4 1966171168
    %v1337 = vunpack.c.0.s8 %v1336
    %v1338 = vlaneseq
    %v1339 = vshrl.u32 %v1338, 7
    %v1340 = vsub.s32 %v1337, %v1339
    %v1341 = vrot.slane %v1334, %v1340
    %v1343 = vlaneseq
    %vm1344 = vcmp.ge.s32.totalorder %v1343, 0
    %vm1345 = vcmp.lt.s32.totalorder %v1343, 256
    %vm1346 = vmand %vm1344, %vm1345
    %1347 = vst.msk [vmem:[#allocation4] sm:$0x3] %vm1346, %v1341
    // Predicated region
    $region10: #{tpu_custom_call.1} parent=1 // pred_check
      _
    $region11: #{tpu_custom_call.1} parent=1 // pred_check_branch
      %1349 = sbr.rel (0) target = $region13
    $region12: #{tpu_custom_call.1} parent=1 // pred_region
      %s1351 = ssub.s32 4096, 4096
      %1352 = vsyncadd [#allocation3], %s1351
      %s1353 = sshll.u32 [#allocation2], 4
      %s1354 = int_to_ptr.vmem [resolvable:$true] %s1353
      %1359 = dma.vmem_to_hbm [thread:$0]  %s1354, 4096, %s2, [#allocation3], 128, 128, 8
    $region13: #{tpu_custom_call.1} parent=1 // pred_fallthru
      _
    // Predicated region
    $region14: #{tpu_custom_call.1} parent=1 // pred_check
      _
    $region15: #{tpu_custom_call.1} parent=1 // pred_check_branch
      %1361 = sbr.rel (0) target = $region17
    $region16: #{tpu_custom_call.1} parent=1 // pred_region
      %s1363 = ssub.s32 32, 32
      %1364 = vsyncadd [#allocation5], %s1363
      %s1366 = sshll.u32 [#allocation4], 4
      %s1367 = int_to_ptr.vmem [resolvable:$true] %s1366
      %1369 = dma.vmem_to_hbm [thread:$0]  %s1367, 32, %s3, [#allocation5]
    $region17: #{tpu_custom_call.1} parent=1 // pred_fallthru
      _
    // Predicated region
    $region18: #{tpu_custom_call.1} parent=1 // pred_check
      _
    $region19: #{tpu_custom_call.1} parent=1 // pred_check_branch
      %1371 = sbr.rel (0) target = $region21
    $region20: #{tpu_custom_call.1} parent=1 // pred_region
      %1372 = dma.done [#allocation3], 4096
    $region21: #{tpu_custom_call.1} parent=1 // pred_fallthru
      _
    // Predicated region
    $region22: #{tpu_custom_call.1} parent=1 // pred_check
      _
    $region23: #{tpu_custom_call.1} parent=1 // pred_check_branch
      %1374 = sbr.rel (0) target = $region25
    $region24: #{tpu_custom_call.1} parent=1 // pred_region
      %1375 = dma.done [#allocation5], 32
    $region25: #{tpu_custom_call.1} parent=1 // pred_fallthru
      _
    %1376 = vsyncpa [#allocation3], 1
    %1377 = vsyncpa [#allocation5], 1

</llo_original>
